<compile_context>
chip_gen: v7x
topology: tpu7x:2x2x1
jax: 0.10.0
libtpu: 0.0.40
codegen_flags: <defaults>
</compile_context>

<pallas_src>
import functools

import jax
import jax.numpy as jnp
from jax.experimental import pallas as pl
from jax.experimental.pallas import tpu as pltpu


def _round_up(x, m):
    return (x + m - 1) // m * m


def _tpu_vmem_capacity_bytes():
    """Per-TensorCore VMEM capacity; conservative fallback = v7x's 64 MiB."""
    try:
        return int(pltpu.get_tpu_info().vmem_capacity_bytes)
    except Exception:
        return 64 * 1024 * 1024


def _is_v5_family():
    try:
        return "v5" in jax.devices()[0].device_kind.lower()
    except Exception:
        return False


def _embedding_onehot_kernel(ids_ref, w_ref, out_ref):
    # ids_ref : (1, T, 1) int32  -- this step's token ids (contiguous T*4B DMA)
    # w_ref   : (V, D_pad)       -- full table, single-buffered, VMEM-resident
    # out_ref : (T, D_pad)       -- lane-dense output tile
    ids = ids_ref[0]                                           # (T, 1)
    V = w_ref.shape[0]
    # (1, V) iota broadcast against (T, 1) ids -> (T, V) one-hot; keeps the
    # materialized iota at O(V) instead of O(T*V).
    vocab_iota = jax.lax.broadcasted_iota(jnp.int32, (1, V), 1)
    onehot = (ids == vocab_iota).astype(w_ref.dtype)           # (T, V)
    # MXU gather: one-hot @ table, f32 accumulate, cast to the table dtype.
    out_ref[...] = jnp.dot(
        onehot, w_ref[...], preferred_element_type=jnp.float32
    ).astype(out_ref.dtype)


@functools.partial(jax.jit, static_argnames=("tokens_per_step",))
def embedding_forward(ids, weight, *, tokens_per_step=512):
    """ids: (B, S) int, weight: (V, D) f32/bf16 -> (B, S, D) in weight dtype."""
    B, S = ids.shape
    V, D = weight.shape
    N = B * S
    w_dtype = weight.dtype
    w_itemsize = jnp.dtype(w_dtype).itemsize

    # Lane-dense output: pad the feature dim up to a multiple of 128.
    D_pad = _round_up(D, 128)

    # Token tile: multiple of 128 when the token count permits, else one tile.
    tps = max(128, _round_up(tokens_per_step, 128))
    T = tps if N > tps else _round_up(N, 8)
    N_pad = _round_up(N, T)
    G = N_pad // T

    # --- generation-aware VMEM budget (per TensorCore) ---------------------
    capacity = _tpu_vmem_capacity_bytes()
    usable = capacity - 8 * 1024 * 1024                 # reserve for Mosaic scratch
    table_bytes = V * D_pad * w_itemsize                # single buffer (Buffered(1))
    out_tile_bytes = 2 * T * D_pad * w_itemsize         # double-buffered out tiles
    ids_tile_bytes = 2 * T * 128 * 4                    # (T,1) int32 lane-pads to (T,128)
    need = table_bytes + out_tile_bytes + ids_tile_bytes + (1 << 20)

    # One-hot matmul is O(V) MXU+VPU work per token: only worth it for small
    # vocabularies. v5e's MXU (~197 TF/s) flips to compute-bound much earlier.
    onehot_max_vocab = 128 if _is_v5_family() else 384

    if need > usable or V > onehot_max_vocab:
        # TODO(synk): in-kernel gather (jnp.take on a VMEM-resident table) for
        # medium vocabularies and a double-buffered HBM row-DMA gather
        # (memory_space=pl.ANY) for tables that exceed per-TC VMEM; for now use
        # XLA's native gather, which is always correct.
        return jnp.take(weight, ids.reshape(N), axis=0).reshape(B, S, D)

    # --- prepare operands ---------------------------------------------------
    w_pad = weight if D_pad == D else jnp.pad(weight, ((0, 0), (0, D_pad - D)))

    flat_ids = ids.reshape(N).astype(jnp.int32)
    if N_pad != N:
        # Padded slots point at row 0; their outputs are sliced off below.
        flat_ids = jnp.pad(flat_ids, (0, N_pad - N))
    ids_3d = flat_ids.reshape(G, T, 1)

    vmem_limit = int(min(usable, max(need + (4 << 20), 32 << 20)))

    out_flat = pl.pallas_call(
        _embedding_onehot_kernel,
        out_shape=jax.ShapeDtypeStruct((N_pad, D_pad), w_dtype),
        grid=(G,),
        in_specs=[
            # Per-step ids tile: contiguous T*4-byte DMA from HBM.
            pl.BlockSpec((1, T, 1), lambda i: (i, 0, 0)),
            # Full table, constant block index -> DMA'd once; Buffered(1)
            # single-buffers it (no 2x VMEM for a never-changing block).
            pl.BlockSpec((V, D_pad), lambda i: (0, 0),
                         pipeline_mode=pl.Buffered(1)),
        ],
        out_specs=pl.BlockSpec((T, D_pad), lambda i: (i, 0)),
        compiler_params=pltpu.CompilerParams(
            # Independent output tiles: shardable across v7x's 2 TensorCores
            # (each TC then holds its own resident table copy — the budget
            # above is therefore computed per-TC).
            dimension_semantics=("parallel",),
            vmem_limit_bytes=vmem_limit,
        ),
    )(ids_3d, w_pad)

    out = out_flat
    if N_pad != N or D_pad != D:
        out = out[:N, :D]
    return out.reshape(B, S, D)


def make_embedding_weight(key, vocab_size, input_dim, pad):
    # nn.Embedding default init: N(0, 1); padding_idx row zeroed (forward
    # semantics of padding_idx).
    w = jax.random.normal(key, (vocab_size, input_dim), dtype=jnp.float32)
    return w.at[pad].set(0.0)


if __name__ == "__main__":
    vocab_size = 50
    input_dim = 32
    pad = 0
    B, S = 2, 8

    key = jax.random.PRNGKey(0)
    k_w, k_ids = jax.random.split(key)

    weight = make_embedding_weight(k_w, vocab_size, input_dim, pad)
    ids = jax.random.randint(k_ids, (B, S), 0, vocab_size, dtype=jnp.int32)
    # Make sure some padding tokens appear (they must map to the zero row).
    ids = ids.at[0, 0].set(pad).at[1, 3].set(pad)

    out = jax.block_until_ready(embedding_forward(ids, weight))

    ref = jnp.take(weight, ids.reshape(-1), axis=0).reshape(B, S, input_dim)
    assert out.shape == (B, S, input_dim)
    assert out.dtype == weight.dtype
    assert jnp.allclose(out, ref), "Pallas embedding mismatch vs reference (f32)"
    assert jnp.all(out[0, 0] == 0.0) and jnp.all(out[1, 3] == 0.0)

    # bf16 table end-to-end (halves resident-table VMEM, native bf16 MXU path).
    w_bf16 = weight.astype(jnp.bfloat16)
    out_bf16 = jax.block_until_ready(embedding_forward(ids, w_bf16))
    ref_bf16 = jnp.take(w_bf16, ids.reshape(-1), axis=0).reshape(B, S, input_dim)
    assert out_bf16.dtype == jnp.bfloat16
    assert jnp.allclose(out_bf16.astype(jnp.float32),
                        ref_bf16.astype(jnp.float32)), "bf16 mismatch"

    print("KERNEL_OK")
</pallas_src>

<mosaic_0001>
module attributes {stable_mosaic.version = 11 : i64} {
  func.func @_embedding_onehot_kernel(%arg0: i32, %arg1: memref<1x16x1xi32, #tpu.memory_space<vmem>>, %arg2: memref<50x128xf32, #tpu.memory_space<vmem>>, %arg3: memref<16x128xf32, #tpu.memory_space<vmem>>) attributes {dimension_semantics = [#tpu.dimension_semantics<parallel>], iteration_bounds = array<i64: 1>, scalar_prefetch = 0 : i64, scratch_operands = 0 : i64, tpu.core_type = #tpu.core_type<tc>, window_params = [{transform_indices = @transform_0, window_bounds = array<i64: 1, 16, 1>}, {pipeline_mode = #tpu.pipeline_mode<synchronous>, transform_indices = @transform_1, window_bounds = array<i64: 50, 128>}, {transform_indices = @transform_2, window_bounds = array<i64: 16, 128>}]} {
    %c0 = arith.constant 0 : index
    %c0_0 = arith.constant 0 : index
    %c0_1 = arith.constant 0 : index
    %0 = vector.load %arg1[%c0, %c0_0, %c0_1] : memref<1x16x1xi32, #tpu.memory_space<vmem>>, vector<1x16x1xi32>
    %1 = vector.shape_cast %0 : vector<1x16x1xi32> to vector<16x1xi32>
    %2 = tpu.iota {dimensions = array<i32: 1>} : vector<1x50xi32>
    %3 = vector.broadcast %1 : vector<16x1xi32> to vector<16x50xi32>
    %4 = vector.broadcast %2 : vector<1x50xi32> to vector<16x50xi32>
    %5 = arith.cmpi eq, %3, %4 : vector<16x50xi32>
    %6 = arith.extui %5 : vector<16x50xi1> to vector<16x50xi32>
    %7 = arith.sitofp %6 : vector<16x50xi32> to vector<16x50xf32>
    %c0_2 = arith.constant 0 : index
    %c0_3 = arith.constant 0 : index
    %8 = vector.load %arg2[%c0_2, %c0_3] : memref<50x128xf32, #tpu.memory_space<vmem>>, vector<50x128xf32>
    %cst = arith.constant dense<0.000000e+00> : vector<16x128xf32>
    %9 = tpu.matmul %7, %8, %cst {dimension_numbers = #tpu.dot_dimension_numbers<[1], [0], [0], [1], [0, 0, 1, 1], [], []>} : vector<16x50xf32>, vector<50x128xf32>, vector<16x128xf32> -> vector<16x128xf32>
    %c0_4 = arith.constant 0 : index
    %c0_5 = arith.constant 0 : index
    %10 = vector.load %arg3[%c0_4, %c0_5] : memref<16x128xf32, #tpu.memory_space<vmem>>, vector<16x128xf32>
    tpu.vector_store %arg3[%c0_4, %c0_5], %9 {strides = array<i32>} : memref<16x128xf32, #tpu.memory_space<vmem>>, vector<16x128xf32>,
    return
  }
  func.func @transform_0(%arg0: i32) -> (i32, i32, i32) {
    %c0_i32 = arith.constant 0 : i32
    %c0_i32_0 = arith.constant 0 : i32
    %c0_i32_1 = arith.constant 0 : i32
    return %arg0, %c0_i32, %c0_i32_0 : i32, i32, i32
  }
  func.func @transform_1(%arg0: i32) -> (i32, i32) {
    %c0_i32 = arith.constant 0 : i32
    %c0_i32_0 = arith.constant 0 : i32
    %c0_i32_1 = arith.constant 0 : i32
    return %c0_i32, %c0_i32_0 : i32, i32
  }
  func.func @transform_2(%arg0: i32) -> (i32, i32) {
    %c0_i32 = arith.constant 0 : i32
    %c0_i32_0 = arith.constant 0 : i32
    return %arg0, %c0_i32 : i32, i32
  }
}

</mosaic_0001>

<llo_original>
// kernel: embedding_forward.1
$region0: #{embedding_forward.1}
  #allocation0 [shape = 'u32[]', space=smem, size = 0x4, offset = 0x4, fixed_abs, tag = 'smem constant byte address 0x4 - core index']
  #allocation1 [shape = 'u32[144,128]{1,0:T(1,128)}', space=vmem, size = 0x12000, scoped, tag = 'internal scratch']
  %s0 = inlined_call_operand.vmem [shape: s32[1,16,1], index: 0, kind: input, shape index: {}]
  %s1 = inlined_call_operand.vmem [shape: f32[50,128], index: 1, kind: input, shape index: {}]
  %s2 = inlined_call_operand.vmem [shape: f32[16,128], index: 2, kind: output, shape index: {}]
  %s3 = sld [smem:[#allocation0]]
  $region18: #{embedding_forward.1} parent=0
    _
  %s5 = ssub.s32 1, %s3
  %s6 = scalar_select 0, %s5, %s3
  // Predicated region
  $region2: #{embedding_forward.1} parent=0 // pred_check
    _
  $region3: #{embedding_forward.1} parent=0 // pred_check_branch
    %8 = sbr.rel (0) target = $region5
  $region4: #{embedding_forward.1} parent=0 // pred_region
    _
  $region5: #{embedding_forward.1} parent=0 // pred_fallthru
    _
  // Predicated region
  $region6: #{embedding_forward.1} parent=0 // pred_check
    _
  $region7: #{embedding_forward.1} parent=0 // pred_check_branch
    %10 = sbr.rel (0) target = $region9
  $region8: #{embedding_forward.1} parent=0 // pred_region
    _
  $region9: #{embedding_forward.1} parent=0 // pred_fallthru
    _
  %v11 = vld [vmem:[%s0] sm:$0xff]
  %v12 = vld [vmem:[%s0 + $0x8] sm:$0xff]
  %v13 = vlaneseq
  %v14 = vand.u32 %v13, 127
  %15 = vset.pattern.permute.xlu0 0
  %16 = vperm.xlu0 %15, %v11
  %v17 = vpop.permute.xlu0 %16
  %18 = vset.pattern.permute.xlu0 0
  %19 = vperm.xlu0 %18, %v12
  %v20 = vpop.permute.xlu0 %19
  %vm21 = vcmp.eq.s32.totalorder %v17, %v14
  %vm22 = vcmp.eq.s32.totalorder %v20, %v14
  %v23 = vsel %vm21, 1, 0
  %v24 = vsel %vm22, 1, 0
  %v25 = vcvt.s32.f32 %v23
  %v26 = vcvt.s32.f32 %v24
  %v27 = vld [vmem:[%s1] sm:$0xff]
  %v28 = vld [vmem:[%s1 + $0x8] sm:$0xff]
  %v29 = vld [vmem:[%s1 + $0x10] sm:$0xff]
  %v30 = vld [vmem:[%s1 + $0x18] sm:$0xff]
  %v31 = vld [vmem:[%s1 + $0x20] sm:$0xff]
  %v32 = vld [vmem:[%s1 + $0x28] sm:$0xff]
  %v33 = vld [vmem:[%s1 + $0x30] sm:$0x3]
  %vm34 = vcmask 408576
  %v36 = vsel %vm34, %v25, 0
  %v39 = vsel %vm34, %v26, 0
  %vm41 = vcmask 1041408
  %v43 = vsel %vm41, %v33, 0
  %45 = vmatprep.subr.mxu0 0.0
  %46 = vmatpush1.msra.mxu0 %v27
  %47 = vmatprep.subr.mxu0 0.0
  %48 = vmatpush1.msra.mxu0 %v28
  %49 = vmatprep.subr.mxu0 0.0
  %50 = vmatpush1.msra.mxu0 %v29
  %51 = vmatprep.subr.mxu0 0.0
  %52 = vmatpush1.msra.mxu0 %v30
  %53 = vmatprep.subr.mxu0 0.0
  %54 = vmatpush1.msra.mxu0 %v31
  %55 = vmatprep.subr.mxu0 0.0
  %56 = vmatpush1.msra.mxu0 %v32
  %57 = vmatprep.subr.mxu0 0.0
  %58 = vmatpush1.msra.mxu0 %v43
  %59 = vmatprep.subr.mxu0 0.0
  %60 = vmatpush1.msra.mxu0 0.0
  %61 = vmatprep.subr.mxu0 0.0
  %62 = vmatpush1.msra.mxu0 0.0
  %63 = vmatprep.subr.mxu0 0.0
  %64 = vmatpush1.msra.mxu0 0.0
  %65 = vmatprep.subr.mxu0 0.0
  %66 = vmatpush1.msra.mxu0 0.0
  %67 = vmatprep.subr.mxu0 0.0
  %68 = vmatpush1.msra.mxu0 0.0
  %69 = vmatprep.subr.mxu0 0.0
  %70 = vmatpush1.msra.mxu0 0.0
  %71 = vmatprep.subr.mxu0 0.0
  %72 = vmatpush1.msra.mxu0 0.0
  %73 = vmatprep.subr.mxu0 0.0
  %74 = vmatpush1.msra.mxu0 0.0
  %75 = vmatprep.subr.mxu0 0.0
  %76 = vmatpush1.msra.mxu0 0.0
  %77 = vmatprep.subr.mxu0 0.0
  %78 = vmatpush1.msra.mxu0 0.0
  %79 = vmatprep.subr.mxu0 0.0
  %80 = vmatpush1.msra.mxu0 0.0
  %81 = vmatprep.subr.mxu0 0.0
  %82 = vmatpush1.msra.mxu0 0.0
  %83 = vmatprep.subr.mxu0 0.0
  %84 = vmatpush1.msra.mxu0 0.0
  %85 = vmatprep.subr.mxu0 0.0
  %86 = vmatpush1.msra.mxu0 0.0
  %87 = vmatprep.subr.mxu0 0.0
  %88 = vmatpush1.msra.mxu0 0.0
  %89 = vmatprep.subr.mxu0 0.0
  %90 = vmatpush1.msra.mxu0 0.0
  %91 = vmatprep.subr.mxu0 0.0
  %92 = vmatpush1.msra.mxu0 0.0
  %93 = vmatprep.subr.mxu0 0.0
  %94 = vmatpush1.msra.mxu0 0.0
  %95 = vmatprep.subr.mxu0 0.0
  %96 = vmatpush1.msra.mxu0 0.0
  %97 = vmatprep.subr.mxu0 0.0
  %98 = vmatpush1.msra.mxu0 0.0
  %99 = vmatprep.subr.mxu0 0.0
  %100 = vmatpush1.msra.mxu0 0.0
  %101 = vmatprep.subr.mxu0 0.0
  %102 = vmatpush1.msra.mxu0 0.0
  %103 = vmatprep.subr.mxu0 0.0
  %104 = vmatpush1.msra.mxu0 0.0
  %105 = vmatprep.subr.mxu0 0.0
  %106 = vmatpush1.msra.mxu0 0.0
  %107 = vmatprep.subr.mxu0 0.0
  %108 = vmatpush1.msra.mxu0 0.0
  %109 = vmatprep.mubr.f32.mxu0 0.0
  %110 = vmatmul.mubr.f32.gmra.mrb[0].mxu0 %v36
  %v111 = vpop.f32.mrb[0].mxu0
  %v112 = vadd.f32 0.0, %v111
  %v113 = vpop.f32.mrb[0].mxu0
  %114 = vmatprep.mubr.f32.mxu0 0.0
  %115 = vmatmul.mubr.f32.gmra.mrb[0].mxu0 %v39
  %v116 = vpop.f32.mrb[0].mxu0
  %v117 = vadd.f32 0.0, %v116
  %v118 = vpop.f32.mrb[0].mxu0
  %119 = vdwg.mxu0
  %120 = vst [vmem:[%s2] sm:$0xff] %v112
  %121 = vst [vmem:[%s2 + $0x8] sm:$0xff] %v117
  // Predicated region
  $region10: #{embedding_forward.1} parent=0 // pred_check
    _
  $region11: #{embedding_forward.1} parent=0 // pred_check_branch
    %123 = sbr.rel (0) target = $region13
  $region12: #{embedding_forward.1} parent=0 // pred_region
    _
  $region13: #{embedding_forward.1} parent=0 // pred_fallthru
    _
  // Predicated region
  $region14: #{embedding_forward.1} parent=0 // pred_check
    _
  $region15: #{embedding_forward.1} parent=0 // pred_check_branch
    %125 = sbr.rel (0) target = $region17
  $region16: #{embedding_forward.1} parent=0 // pred_region
    _
  $region17: #{embedding_forward.1} parent=0 // pred_fallthru
    _

</llo_original>
